<compile_context>
chip_gen: v7x
topology: tpu7x:2x2x1
jax: 0.10.0
libtpu: 0.0.40
codegen_flags: <defaults>
</compile_context>

<pallas_src>
import jax
import jax.numpy as jnp
from jax.experimental import pallas as pl
from jax.experimental.pallas import tpu as pltpu

_LANES = 128
_TILE_BYTES = 2 << 20           # 2 MiB per VMEM buffer per operand
_PALLAS_MIN_ELEMS = 64 * 1024   # below this, a fused XLA elementwise beats a custom call
_VMEM_LIMIT = 32 << 20          # fits (3 in + 1 out) * 2 bufs * 2 MiB with headroom on all chips


def _mean2_kernel(a_ref, b_ref, o_ref):
    o_ref[...] = ((a_ref[...] + b_ref[...]) * 0.5).astype(o_ref.dtype)


def _mean3_kernel(a_ref, b_ref, c_ref, o_ref):
    s = a_ref[...] + b_ref[...] + c_ref[...]
    o_ref[...] = (s * (1.0 / 3.0)).astype(o_ref.dtype)   # mul by reciprocal, not divide


def _mean_jnp(arrs):
    """Fused-XLA fallback for tiny shapes (custom-call overhead would dominate)."""
    if len(arrs) == 2:
        return (arrs[0] + arrs[1]) * 0.5
    return (arrs[0] + arrs[1] + arrs[2]) * (1.0 / 3.0)


def _mean_pallas(arrs):
    """Elementwise mean of 2 or 3 same-shape arrays via a tiled Pallas kernel."""
    shape = arrs[0].shape
    dtype = jnp.dtype(arrs[0].dtype)
    total = arrs[0].size

    # Fast path: small inputs (e.g. the production 8x32 case) stay in fused XLA.
    if total < _PALLAS_MIN_ELEMS:
        return _mean_jnp(arrs)

    itemsize = dtype.itemsize
    # dtype-aware sublane alignment: f32 -> 8 rows, bf16 -> 16, int8/fp8 -> 32.
    row_align = max(8, 32 // itemsize)

    # Rows of the lane-dense [rows, 128] slab, padded up to the sublane alignment.
    rows = pl.cdiv(total, _LANES)
    rows = ((rows + row_align - 1) // row_align) * row_align

    # Tile: <= 2 MiB per buffer, and at least 2 grid steps so both v7x TCs get work.
    cap_rows = max(row_align,
                   (_TILE_BYTES // (_LANES * itemsize)) // row_align * row_align)
    half_rows = max(row_align, (rows // 2) // row_align * row_align)
    tile_r = min(cap_rows, half_rows)
    # Prefer a tile that divides rows (full last block -> unmasked stores); bounded
    # search so we never degenerate to tiny tiles when rows factors awkwardly.
    for cand in range(tile_r, max(row_align, tile_r - 16 * row_align) - 1, -row_align):
        if rows % cand == 0:
            tile_r = cand
            break

    padded = rows * _LANES
    if padded == total:
        # Pure reshape view: no jnp.pad copy, no trailing slice copy.
        mats = [a.reshape(rows, _LANES) for a in arrs]
    else:
        mats = [jnp.pad(a.reshape(-1), (0, padded - total)).reshape(rows, _LANES)
                for a in arrs]

    grid = (pl.cdiv(rows, tile_r),)
    spec = pl.BlockSpec((tile_r, _LANES), lambda i: (i, 0))
    kernel = _mean2_kernel if len(arrs) == 2 else _mean3_kernel

    out = pl.pallas_call(
        kernel,
        out_shape=jax.ShapeDtypeStruct((rows, _LANES), dtype),
        grid=grid,
        in_specs=[spec] * len(arrs),
        out_specs=spec,
        compiler_params=pltpu.CompilerParams(
            dimension_semantics=("parallel",),
            vmem_limit_bytes=_VMEM_LIMIT),
    )(*mats)

    if padded == total:
        return out.reshape(shape)
    return out.reshape(-1)[:total].reshape(shape)


def _has_data(x):
    """True iff x is a non-empty tensor-like (mirrors `len(embeds3) > 0`)."""
    if x is None:
        return False
    if hasattr(x, "shape"):
        return int(x.size) > 0
    try:
        return len(x) > 0
    except TypeError:
        return False


def mean_set(embeds1, embeds1_o, embeds2, embeds2_o, embeds3=None, embeds3_o=None):
    """JAX/Pallas equivalent of MeanSet.forward.

    embeds*_o are accepted (to mirror the PyTorch signature) but unused, just
    like in the reference implementation.
    """
    del embeds1_o, embeds2_o, embeds3_o  # unused, matching the reference

    if _has_data(embeds3):
        return _mean_pallas([embeds1, embeds2, embeds3])
    return _mean_pallas([embeds1, embeds2])


if __name__ == "__main__":
    key = jax.random.PRNGKey(0)
    keys = jax.random.split(key, 15)

    # --- production-like small shape: seq=8, hidden=32 (takes the fused-XLA fast path) ---
    N, D = 8, 32
    e1, e2, e3 = (jax.random.normal(k, (N, D), dtype=jnp.float32) for k in keys[:3])
    e1o, e2o, e3o = (jax.random.normal(k, (N, D), dtype=jnp.float32) for k in keys[3:6])

    out2 = jax.block_until_ready(mean_set(e1, e1o, e2, e2o))
    ref2 = jnp.mean(jnp.stack([e1, e2], axis=0), axis=0)
    assert jnp.allclose(out2, ref2, atol=1e-6), "2-tensor mean mismatch"

    out2b = jax.block_until_ready(mean_set(e1, e1o, e2, e2o, [], []))
    assert jnp.allclose(out2b, ref2, atol=1e-6), "empty-embeds3 dispatch mismatch"

    out3 = jax.block_until_ready(mean_set(e1, e1o, e2, e2o, e3, e3o))
    ref3 = jnp.mean(jnp.stack([e1, e2, e3], axis=0), axis=0)
    assert jnp.allclose(out3, ref3, atol=1e-6), "3-tensor mean mismatch"

    # --- larger embeddings that exercise the Pallas kernel itself ---
    # pad-free path (element count is a multiple of the 8*128 chunk)
    M, H = 1024, 256
    b1, b2, b3 = (jax.random.normal(k, (M, H), dtype=jnp.float32) for k in keys[6:9])
    big2 = jax.block_until_ready(mean_set(b1, b1, b2, b2))
    assert jnp.allclose(big2, (b1 + b2) * 0.5, atol=1e-6), "pallas 2-tensor mismatch"
    big3 = jax.block_until_ready(mean_set(b1, b1, b2, b2, b3, b3))
    assert jnp.allclose(big3, (b1 + b2 + b3) / 3.0, atol=1e-5), "pallas 3-tensor mismatch"

    # padded path (odd element count)
    M2, H2 = 513, 131
    c1, c2, c3 = (jax.random.normal(k, (M2, H2), dtype=jnp.float32) for k in keys[9:12])
    odd3 = jax.block_until_ready(mean_set(c1, c1, c2, c2, c3, c3))
    assert jnp.allclose(odd3, (c1 + c2 + c3) / 3.0, atol=1e-5), "pallas padded-path mismatch"

    # bf16 path (dtype-aware sublane alignment, arithmetic stays in bf16)
    M3, H3 = 1024, 160
    d1, d2 = (jax.random.normal(k, (M3, H3), dtype=jnp.bfloat16) for k in keys[12:14])
    bf2 = jax.block_until_ready(mean_set(d1, d1, d2, d2))
    assert jnp.allclose(bf2, (d1 + d2) * 0.5, atol=1e-2), "pallas bf16 mismatch"

    print("KERNEL_OK")
</pallas_src>

<mosaic_0001>
module attributes {stable_mosaic.version = 11 : i64} {
  func.func @_mean2_kernel(%arg0: i32, %arg1: memref<1024x128xf32, #tpu.memory_space<vmem>>, %arg2: memref<1024x128xf32, #tpu.memory_space<vmem>>, %arg3: memref<1024x128xf32, #tpu.memory_space<vmem>>) attributes {dimension_semantics = [#tpu.dimension_semantics<parallel>], iteration_bounds = array<i64: 2>, scalar_prefetch = 0 : i64, scratch_operands = 0 : i64, tpu.core_type = #tpu.core_type<tc>, window_params = [{transform_indices = @transform_0, window_bounds = array<i64: 1024, 128>}, {transform_indices = @transform_1, window_bounds = array<i64: 1024, 128>}, {transform_indices = @transform_2, window_bounds = array<i64: 1024, 128>}]} {
    %c0 = arith.constant 0 : index
    %c0_0 = arith.constant 0 : index
    %0 = vector.load %arg1[%c0, %c0_0] : memref<1024x128xf32, #tpu.memory_space<vmem>>, vector<1024x128xf32>
    %c0_1 = arith.constant 0 : index
    %c0_2 = arith.constant 0 : index
    %1 = vector.load %arg2[%c0_1, %c0_2] : memref<1024x128xf32, #tpu.memory_space<vmem>>, vector<1024x128xf32>
    %2 = arith.addf %0, %1 : vector<1024x128xf32>
    %cst = arith.constant 5.000000e-01 : f32
    %3 = vector.broadcast %cst : f32 to vector<1024x128xf32>
    %4 = arith.mulf %2, %3 : vector<1024x128xf32>
    %c0_3 = arith.constant 0 : index
    %c0_4 = arith.constant 0 : index
    %5 = vector.load %arg3[%c0_3, %c0_4] : memref<1024x128xf32, #tpu.memory_space<vmem>>, vector<1024x128xf32>
    tpu.vector_store %arg3[%c0_3, %c0_4], %4 {strides = array<i32>} : memref<1024x128xf32, #tpu.memory_space<vmem>>, vector<1024x128xf32>,
    return
  }
  func.func @transform_0(%arg0: i32) -> (i32, i32) {
    %c0_i32 = arith.constant 0 : i32
    %c0_i32_0 = arith.constant 0 : i32
    return %arg0, %c0_i32 : i32, i32
  }
  func.func @transform_1(%arg0: i32) -> (i32, i32) {
    %c0_i32 = arith.constant 0 : i32
    %c0_i32_0 = arith.constant 0 : i32
    return %arg0, %c0_i32 : i32, i32
  }
  func.func @transform_2(%arg0: i32) -> (i32, i32) {
    %c0_i32 = arith.constant 0 : i32
    %c0_i32_0 = arith.constant 0 : i32
    return %arg0, %c0_i32 : i32, i32
  }
}

</mosaic_0001>

<llo_original>
// kernel: tpu_custom_call.1
$region0: #{tpu_custom_call.1}
  #allocation0 [shape = 'u32[]', space=smem, size = 0x4, offset = 0x4, fixed_abs, tag = 'smem constant byte address 0x4 - core index']
  #allocation1 [shape = 'u32[144,128]{1,0:T(1,128)}', space=vmem, size = 0x12000, scoped, tag = 'internal scratch']
  %s0 = inlined_call_operand.hbm [shape: f32[2048,128], index: 0, kind: input, shape index: {}]
  %s1 = inlined_call_operand.hbm [shape: f32[2048,128], index: 1, kind: input, shape index: {}]
  %s2 = inlined_call_operand.hbm [shape: f32[2048,128], index: 2, kind: output, shape index: {}]
  %s3 = sld [smem:[#allocation0]]
  $region49: #{tpu_custom_call.1} parent=0
    _
  %s5 = ssub.s32 1, %s3
  %s6 = scalar_select 0, %s5, %s3
  $region1: #{tpu_custom_call.1} parent=0
    #allocation2 [shape = 'u8[1048576]{0}', space=vmem, size = 0x100000, scoped, tag = 'input window, operand 0']
    #allocation3 [shape = 's32[2]{0}', space=sflag, size = 0x8, scoped, tag = 'scoped memory for tpu_custom_call.1']
    #allocation4 [shape = 's32[2]{0}', space=sflag, size = 0x8, scoped, tag = 'scoped memory for tpu_custom_call.1']
    #allocation5 [shape = 'u8[1048576]{0}', space=vmem, size = 0x100000, scoped, tag = 'input window, operand 1']
    #allocation6 [shape = 's32[2]{0}', space=sflag, size = 0x8, scoped, tag = 'scoped memory for tpu_custom_call.1']
    #allocation7 [shape = 'u8[1048576]{0}', space=vmem, size = 0x100000, scoped, tag = 'output window, operand 0']
    %7 = vsyncpa [#allocation3], 0
    %s8 = scalar_lea.sflag [#allocation3], 1
    %9 = vsyncpa %s8, 0
    %10 = vsyncpa [#allocation6], 0
    %s11 = scalar_lea.sflag [#allocation6], 1
    %12 = vsyncpa %s11, 0
    %13 = vsyncpa [#allocation4], 0
    %s14 = scalar_lea.sflag [#allocation4], 1
    %15 = vsyncpa %s14, 0
    loop: start=0, step=1, limit=4
    $region2: #{tpu_custom_call.1} parent=1 // loop_pre_header
      _
    $region3: #{tpu_custom_call.1} parent=1 // loop_header
      %s17 = sphi 0, %s21
      %p18 = scmp.ge.s32.totalorder %s17, 4
      %s27 = sphi 0, %s29
      %s30 = sphi 0, %s27
      %s31 = sphi 0, %s30
      %s47 = sphi 0, %s31
      %s53 = sphi 0, %s55
      %s56 = sphi 0, %s53
      %s57 = sphi 0, %s56
      %s73 = sphi 0, %s57
      %s79 = sphi 0, %s81
      %s82 = sphi 0, %s79
      %s83 = sphi 0, %s82
      %s99 = sphi 0, %s83
    $region4: #{tpu_custom_call.1} parent=1 // loop_header_branch
      %20 = sbr.rel (%p18) target = $region8
    $region5: #{tpu_custom_call.1} parent=1 // loop_body
      %s22 = ssub.s32 %s17, 1
      %s23 = ssub.s32 %s17, 2
      %s24 = sadd.s32 %s17, 1
      %s25 = ssub.s32 %s17, %s24
      %p26 = scmp.eq.s32.totalorder %s25, 0
      %s28 = sadd.s32 %s27, 1
      %s29 = scalar_select %p26, %s27, %s28
      %p32 = pneg %p26
      %p33 = scmp.eq.s32.totalorder %s17, 1
      %p34 = por %p32, %p33
      %p35 = scmp.ne.s32.totalorder %s27, %s30
      %p36 = scmp.eq.s32.totalorder %s17, 0
      %p37 = por %p35, %p36
      %p38 = scmp.ne.s32.totalorder %s27, %s30
      %p39 = scmp.eq.s32.totalorder %s22, 1
      %p40 = por %p38, %p39
      %p41 = scmp.ne.s32.totalorder %s30, %s31
      %p42 = scmp.eq.s32.totalorder %s22, 0
      %p43 = por %p41, %p42
      %p44 = scmp.ne.s32.totalorder %s30, %s31
      %p45 = scmp.eq.s32.totalorder %s23, 1
      %p46 = por %p44, %p45
      %p48 = scmp.ne.s32.totalorder %s31, %s47
      %p49 = scmp.eq.s32.totalorder %s23, 0
      %p50 = por %p48, %p49
      %s51 = ssub.s32 %s17, %s24
      %p52 = scmp.eq.s32.totalorder %s51, 0
      %s54 = sadd.s32 %s53, 1
      %s55 = scalar_select %p52, %s53, %s54
      %p58 = pneg %p52
      %p59 = scmp.eq.s32.totalorder %s17, 1
      %p60 = por %p58, %p59
      %p61 = scmp.ne.s32.totalorder %s53, %s56
      %p62 = scmp.eq.s32.totalorder %s17, 0
      %p63 = por %p61, %p62
      %p64 = scmp.ne.s32.totalorder %s53, %s56
      %p65 = scmp.eq.s32.totalorder %s22, 1
      %p66 = por %p64, %p65
      %p67 = scmp.ne.s32.totalorder %s56, %s57
      %p68 = scmp.eq.s32.totalorder %s22, 0
      %p69 = por %p67, %p68
      %p70 = scmp.ne.s32.totalorder %s56, %s57
      %p71 = scmp.eq.s32.totalorder %s23, 1
      %p72 = por %p70, %p71
      %p74 = scmp.ne.s32.totalorder %s57, %s73
      %p75 = scmp.eq.s32.totalorder %s23, 0
      %p76 = por %p74, %p75
      %s77 = ssub.s32 %s17, %s24
      %p78 = scmp.eq.s32.totalorder %s77, 0
      %s80 = sadd.s32 %s79, 1
      %s81 = scalar_select %p78, %s79, %s80
      %p84 = pneg %p78
      %p85 = scmp.eq.s32.totalorder %s17, 1
      %p86 = por %p84, %p85
      %p87 = scmp.ne.s32.totalorder %s79, %s82
      %p88 = scmp.eq.s32.totalorder %s17, 0
      %p89 = por %p87, %p88
      %p90 = scmp.ne.s32.totalorder %s79, %s82
      %p91 = scmp.eq.s32.totalorder %s22, 1
      %p92 = por %p90, %p91
      %p93 = scmp.ne.s32.totalorder %s82, %s83
      %p94 = scmp.eq.s32.totalorder %s22, 0
      %p95 = por %p93, %p94
      %p96 = scmp.ne.s32.totalorder %s82, %s83
      %p97 = scmp.eq.s32.totalorder %s23, 1
      %p98 = por %p96, %p97
      %p100 = scmp.ne.s32.totalorder %s83, %s99
      %p101 = scmp.eq.s32.totalorder %s23, 0
      %p102 = por %p100, %p101
      %p103 = scmp.le.s32.totalorder 1, %s17
      %p104 = scmp.lt.s32.totalorder %s17, 3
      %p105 = pnand %p103, %p104
      %p106 = pneg %p105
      // Predicated region
      $region9: #{tpu_custom_call.1} parent=5 // pred_check
        _
      $region10: #{tpu_custom_call.1} parent=5 // pred_check_branch
        %108 = sbr.rel (%p105) target = $region12
      $region11: #{tpu_custom_call.1} parent=5 // pred_region
        %s109 = ssub.s32 %s17, 1
      $region12: #{tpu_custom_call.1} parent=5 // pred_fallthru
        _
      %p110 = scmp.lt.s32.totalorder %s17, 2
      // Predicated region
      $region13: #{tpu_custom_call.1} parent=5 // pred_check
        %p111 = pneg %p110
      $region14: #{tpu_custom_call.1} parent=5 // pred_check_branch
        %113 = sbr.rel (%p111) target = $region16
      $region15: #{tpu_custom_call.1} parent=5 // pred_region
        // Predicated region
        $region17: #{tpu_custom_call.1} parent=15 // pred_check
          %p114 = pneg %p37
        $region18: #{tpu_custom_call.1} parent=15 // pred_check_branch
          %116 = sbr.rel (%p114) target = $region20
        $region19: #{tpu_custom_call.1} parent=15 // pred_region
          %s117 = sand.u32 %s27, 1
          %s118 = scalar_lea.sflag [#allocation3], %s117
          %s119 = sand.u32 %s27, 1
          %s120 = smul.addr %s119, 1024
          %s121 = scalar_lea.vmem [#allocation2], %s120
          %s122 = smul.u32 128, %s17
          %s124 = ssub.s32 16384, 16384
          %125 = vsyncadd %s118, %s124
          %s126 = smul.addr %s122, 128
          %s127 = scalar_lea.hbm %s0, %s126
          %s128 = sshll.u32 %s121, 4
          %s129 = int_to_ptr.vmem [resolvable:$true] %s128
          %134 = dma.hbm_to_vmem [thread:$0]  %s127, 16384, %s129, %s118, 128, 128, 8
        $region20: #{tpu_custom_call.1} parent=15 // pred_fallthru
          _
        // Predicated region
        $region21: #{tpu_custom_call.1} parent=15 // pred_check
          %p135 = pneg %p63
        $region22: #{tpu_custom_call.1} parent=15 // pred_check_branch
          %137 = sbr.rel (%p135) target = $region24
        $region23: #{tpu_custom_call.1} parent=15 // pred_region
          %s138 = sand.u32 %s53, 1
          %s139 = scalar_lea.sflag [#allocation6], %s138
          %s140 = sand.u32 %s53, 1
          %s141 = smul.addr %s140, 1024
          %s142 = scalar_lea.vmem [#allocation5], %s141
          %s143 = smul.u32 128, %s17
          %s145 = ssub.s32 16384, 16384
          %146 = vsyncadd %s139, %s145
          %s147 = smul.addr %s143, 128
          %s148 = scalar_lea.hbm %s1, %s147
          %s149 = sshll.u32 %s142, 4
          %s150 = int_to_ptr.vmem [resolvable:$true] %s149
          %155 = dma.hbm_to_vmem [thread:$0]  %s148, 16384, %s150, %s139, 128, 128, 8
        $region24: #{tpu_custom_call.1} parent=15 // pred_fallthru
          _
      $region16: #{tpu_custom_call.1} parent=5 // pred_fallthru
        _
      %p156 = scmp.le.s32.totalorder 1, %s17
      %p157 = scmp.lt.s32.totalorder %s17, 3
      %p158 = pnand %p156, %p157
      %p159 = pneg %p158
      // Predicated region
      $region25: #{tpu_custom_call.1} parent=5 // pred_check
        _
      $region26: #{tpu_custom_call.1} parent=5 // pred_check_branch
        %161 = sbr.rel (%p158) target = $region28
      $region27: #{tpu_custom_call.1} parent=5 // pred_region
        %s162 = ssub.s32 %s17, 1
        %s163 = sand.u32 %s30, 1
        %s164 = scalar_lea.sflag [#allocation3], %s163
        %s165 = sand.u32 %s30, 1
        %s166 = smul.addr %s165, 1024
        %s167 = scalar_lea.vmem [#allocation2], %s166
        // Predicated region
        $region29: #{tpu_custom_call.1} parent=27 // pred_check
          %p168 = pneg %p43
        $region30: #{tpu_custom_call.1} parent=27 // pred_check_branch
          %170 = sbr.rel (%p168) target = $region32
        $region31: #{tpu_custom_call.1} parent=27 // pred_region
          %171 = dma.done %s164, 16384
        $region32: #{tpu_custom_call.1} parent=27 // pred_fallthru
          _
        %s172 = sand.u32 %s56, 1
        %s173 = scalar_lea.sflag [#allocation6], %s172
        %s174 = sand.u32 %s56, 1
        %s175 = smul.addr %s174, 1024
        %s176 = scalar_lea.vmem [#allocation5], %s175
        // Predicated region
        $region33: #{tpu_custom_call.1} parent=27 // pred_check
          %p177 = pneg %p69
        $region34: #{tpu_custom_call.1} parent=27 // pred_check_branch
          %179 = sbr.rel (%p177) target = $region36
        $region35: #{tpu_custom_call.1} parent=27 // pred_region
          %180 = dma.done %s173, 16384
        $region36: #{tpu_custom_call.1} parent=27 // pred_fallthru
          _
        %s181 = sand.u32 %s30, 1
        %s182 = scalar_lea.sflag [#allocation3], %s181
        %s183 = sand.u32 %s30, 1
        %s184 = smul.addr %s183, 1024
        %s185 = scalar_lea.vmem [#allocation2], %s184
        %p186 = pneg %p43
        %p187 = pneg %p40
        %s188 = sand.u32 %s56, 1
        %s189 = scalar_lea.sflag [#allocation6], %s188
        %s190 = sand.u32 %s56, 1
        %s191 = smul.addr %s190, 1024
        %s192 = scalar_lea.vmem [#allocation5], %s191
        %p193 = pneg %p69
        %p194 = pneg %p66
        %p195 = pneg %p95
        %p196 = pneg %p92
        %s197 = sand.u32 %s82, 1
        %s198 = scalar_lea.sflag [#allocation4], %s197
        %s199 = sand.u32 %s82, 1
        %s200 = smul.addr %s199, 1024
        %s201 = scalar_lea.vmem [#allocation7], %s200
        %s202 = smul.u32 128, %s22
        %s203 = smul.u32 128, %s22
        %s204 = smul.u32 128, %s22
        %v205 = vld [vmem:[%s167] sm:$0xff]
        %v206 = vld [vmem:[%s167 + $0x8] sm:$0xff]
        %v207 = vld [vmem:[%s167 + $0x10] sm:$0xff]
        %v208 = vld [vmem:[%s167 + $0x18] sm:$0xff]
        %v209 = vld [vmem:[%s167 + $0x20] sm:$0xff]
        %v210 = vld [vmem:[%s167 + $0x28] sm:$0xff]
        %v211 = vld [vmem:[%s167 + $0x30] sm:$0xff]
        %v212 = vld [vmem:[%s167 + $0x38] sm:$0xff]
        %v213 = vld [vmem:[%s167 + $0x40] sm:$0xff]
        %v214 = vld [vmem:[%s167 + $0x48] sm:$0xff]
        %v215 = vld [vmem:[%s167 + $0x50] sm:$0xff]
        %v216 = vld [vmem:[%s167 + $0x58] sm:$0xff]
        %v217 = vld [vmem:[%s167 + $0x60] sm:$0xff]
        %v218 = vld [vmem:[%s167 + $0x68] sm:$0xff]
        %v219 = vld [vmem:[%s167 + $0x70] sm:$0xff]
        %v220 = vld [vmem:[%s167 + $0x78] sm:$0xff]
        %v221 = vld [vmem:[%s167 + $0x80] sm:$0xff]
        %v222 = vld [vmem:[%s167 + $0x88] sm:$0xff]
        %v223 = vld [vmem:[%s167 + $0x90] sm:$0xff]
        %v224 = vld [vmem:[%s167 + $0x98] sm:$0xff]
        %v225 = vld [vmem:[%s167 + $0xa0] sm:$0xff]
        %v226 = vld [vmem:[%s167 + $0xa8] sm:$0xff]
        %v227 = vld [vmem:[%s167 + $0xb0] sm:$0xff]
        %v228 = vld [vmem:[%s167 + $0xb8] sm:$0xff]
        %v229 = vld [vmem:[%s167 + $0xc0] sm:$0xff]
        %v230 = vld [vmem:[%s167 + $0xc8] sm:$0xff]
        %v231 = vld [vmem:[%s167 + $0xd0] sm:$0xff]
        %v232 = vld [vmem:[%s167 + $0xd8] sm:$0xff]
        %v233 = vld [vmem:[%s167 + $0xe0] sm:$0xff]
        %v234 = vld [vmem:[%s167 + $0xe8] sm:$0xff]
        %v235 = vld [vmem:[%s167 + $0xf0] sm:$0xff]
        %v236 = vld [vmem:[%s167 + $0xf8] sm:$0xff]
        %v237 = vld [vmem:[%s167 + $0x100] sm:$0xff]
        %v238 = vld [vmem:[%s167 + $0x108] sm:$0xff]
        %v239 = vld [vmem:[%s167 + $0x110] sm:$0xff]
        %v240 = vld [vmem:[%s167 + $0x118] sm:$0xff]
        %v241 = vld [vmem:[%s167 + $0x120] sm:$0xff]
        %v242 = vld [vmem:[%s167 + $0x128] sm:$0xff]
        %v243 = vld [vmem:[%s167 + $0x130] sm:$0xff]
        %v244 = vld [vmem:[%s167 + $0x138] sm:$0xff]
        %v245 = vld [vmem:[%s167 + $0x140] sm:$0xff]
        %v246 = vld [vmem:[%s167 + $0x148] sm:$0xff]
        %v247 = vld [vmem:[%s167 + $0x150] sm:$0xff]
        %v248 = vld [vmem:[%s167 + $0x158] sm:$0xff]
        %v249 = vld [vmem:[%s167 + $0x160] sm:$0xff]
        %v250 = vld [vmem:[%s167 + $0x168] sm:$0xff]
        %v251 = vld [vmem:[%s167 + $0x170] sm:$0xff]
        %v252 = vld [vmem:[%s167 + $0x178] sm:$0xff]
        %v253 = vld [vmem:[%s167 + $0x180] sm:$0xff]
        %v254 = vld [vmem:[%s167 + $0x188] sm:$0xff]
        %v255 = vld [vmem:[%s167 + $0x190] sm:$0xff]
        %v256 = vld [vmem:[%s167 + $0x198] sm:$0xff]
        %v257 = vld [vmem:[%s167 + $0x1a0] sm:$0xff]
        %v258 = vld [vmem:[%s167 + $0x1a8] sm:$0xff]
        %v259 = vld [vmem:[%s167 + $0x1b0] sm:$0xff]
        %v260 = vld [vmem:[%s167 + $0x1b8] sm:$0xff]
        %v261 = vld [vmem:[%s167 + $0x1c0] sm:$0xff]
        %v262 = vld [vmem:[%s167 + $0x1c8] sm:$0xff]
        %v263 = vld [vmem:[%s167 + $0x1d0] sm:$0xff]
        %v264 = vld [vmem:[%s167 + $0x1d8] sm:$0xff]
        %v265 = vld [vmem:[%s167 + $0x1e0] sm:$0xff]
        %v266 = vld [vmem:[%s167 + $0x1e8] sm:$0xff]
        %v267 = vld [vmem:[%s167 + $0x1f0] sm:$0xff]
        %v268 = vld [vmem:[%s167 + $0x1f8] sm:$0xff]
        %v269 = vld [vmem:[%s167 + $0x200] sm:$0xff]
        %v270 = vld [vmem:[%s167 + $0x208] sm:$0xff]
        %v271 = vld [vmem:[%s167 + $0x210] sm:$0xff]
        %v272 = vld [vmem:[%s167 + $0x218] sm:$0xff]
        %v273 = vld [vmem:[%s167 + $0x220] sm:$0xff]
        %v274 = vld [vmem:[%s167 + $0x228] sm:$0xff]
        %v275 = vld [vmem:[%s167 + $0x230] sm:$0xff]
        %v276 = vld [vmem:[%s167 + $0x238] sm:$0xff]
        %v277 = vld [vmem:[%s167 + $0x240] sm:$0xff]
        %v278 = vld [vmem:[%s167 + $0x248] sm:$0xff]
        %v279 = vld [vmem:[%s167 + $0x250] sm:$0xff]
        %v280 = vld [vmem:[%s167 + $0x258] sm:$0xff]
        %v281 = vld [vmem:[%s167 + $0x260] sm:$0xff]
        %v282 = vld [vmem:[%s167 + $0x268] sm:$0xff]
        %v283 = vld [vmem:[%s167 + $0x270] sm:$0xff]
        %v284 = vld [vmem:[%s167 + $0x278] sm:$0xff]
        %v285 = vld [vmem:[%s167 + $0x280] sm:$0xff]
        %v286 = vld [vmem:[%s167 + $0x288] sm:$0xff]
        %v287 = vld [vmem:[%s167 + $0x290] sm:$0xff]
        %v288 = vld [vmem:[%s167 + $0x298] sm:$0xff]
        %v289 = vld [vmem:[%s167 + $0x2a0] sm:$0xff]
        %v290 = vld [vmem:[%s167 + $0x2a8] sm:$0xff]
        %v291 = vld [vmem:[%s167 + $0x2b0] sm:$0xff]
        %v292 = vld [vmem:[%s167 + $0x2b8] sm:$0xff]
        %v293 = vld [vmem:[%s167 + $0x2c0] sm:$0xff]
        %v294 = vld [vmem:[%s167 + $0x2c8] sm:$0xff]
        %v295 = vld [vmem:[%s167 + $0x2d0] sm:$0xff]
        %v296 = vld [vmem:[%s167 + $0x2d8] sm:$0xff]
        %v297 = vld [vmem:[%s167 + $0x2e0] sm:$0xff]
        %v298 = vld [vmem:[%s167 + $0x2e8] sm:$0xff]
        %v299 = vld [vmem:[%s167 + $0x2f0] sm:$0xff]
        %v300 = vld [vmem:[%s167 + $0x2f8] sm:$0xff]
        %v301 = vld [vmem:[%s167 + $0x300] sm:$0xff]
        %v302 = vld [vmem:[%s167 + $0x308] sm:$0xff]
        %v303 = vld [vmem:[%s167 + $0x310] sm:$0xff]
        %v304 = vld [vmem:[%s167 + $0x318] sm:$0xff]
        %v305 = vld [vmem:[%s167 + $0x320] sm:$0xff]
        %v306 = vld [vmem:[%s167 + $0x328] sm:$0xff]
        %v307 = vld [vmem:[%s167 + $0x330] sm:$0xff]
        %v308 = vld [vmem:[%s167 + $0x338] sm:$0xff]
        %v309 = vld [vmem:[%s167 + $0x340] sm:$0xff]
        %v310 = vld [vmem:[%s167 + $0x348] sm:$0xff]
        %v311 = vld [vmem:[%s167 + $0x350] sm:$0xff]
        %v312 = vld [vmem:[%s167 + $0x358] sm:$0xff]
        %v313 = vld [vmem:[%s167 + $0x360] sm:$0xff]
        %v314 = vld [vmem:[%s167 + $0x368] sm:$0xff]
        %v315 = vld [vmem:[%s167 + $0x370] sm:$0xff]
        %v316 = vld [vmem:[%s167 + $0x378] sm:$0xff]
        %v317 = vld [vmem:[%s167 + $0x380] sm:$0xff]
        %v318 = vld [vmem:[%s167 + $0x388] sm:$0xff]
        %v319 = vld [vmem:[%s167 + $0x390] sm:$0xff]
        %v320 = vld [vmem:[%s167 + $0x398] sm:$0xff]
        %v321 = vld [vmem:[%s167 + $0x3a0] sm:$0xff]
        %v322 = vld [vmem:[%s167 + $0x3a8] sm:$0xff]
        %v323 = vld [vmem:[%s167 + $0x3b0] sm:$0xff]
        %v324 = vld [vmem:[%s167 + $0x3b8] sm:$0xff]
        %v325 = vld [vmem:[%s167 + $0x3c0] sm:$0xff]
        %v326 = vld [vmem:[%s167 + $0x3c8] sm:$0xff]
        %v327 = vld [vmem:[%s167 + $0x3d0] sm:$0xff]
        %v328 = vld [vmem:[%s167 + $0x3d8] sm:$0xff]
        %v329 = vld [vmem:[%s167 + $0x3e0] sm:$0xff]
        %v330 = vld [vmem:[%s167 + $0x3e8] sm:$0xff]
        %v331 = vld [vmem:[%s167 + $0x3f0] sm:$0xff]
        %v332 = vld [vmem:[%s167 + $0x3f8] sm:$0xff]
        %v333 = vld [vmem:[%s176] sm:$0xff]
        %v334 = vld [vmem:[%s176 + $0x8] sm:$0xff]
        %v335 = vld [vmem:[%s176 + $0x10] sm:$0xff]
        %v336 = vld [vmem:[%s176 + $0x18] sm:$0xff]
        %v337 = vld [vmem:[%s176 + $0x20] sm:$0xff]
        %v338 = vld [vmem:[%s176 + $0x28] sm:$0xff]
        %v339 = vld [vmem:[%s176 + $0x30] sm:$0xff]
        %v340 = vld [vmem:[%s176 + $0x38] sm:$0xff]
        %v341 = vld [vmem:[%s176 + $0x40] sm:$0xff]
        %v342 = vld [vmem:[%s176 + $0x48] sm:$0xff]
        %v343 = vld [vmem:[%s176 + $0x50] sm:$0xff]
        %v344 = vld [vmem:[%s176 + $0x58] sm:$0xff]
        %v345 = vld [vmem:[%s176 + $0x60] sm:$0xff]
        %v346 = vld [vmem:[%s176 + $0x68] sm:$0xff]
        %v347 = vld [vmem:[%s176 + $0x70] sm:$0xff]
        %v348 = vld [vmem:[%s176 + $0x78] sm:$0xff]
        %v349 = vld [vmem:[%s176 + $0x80] sm:$0xff]
        %v350 = vld [vmem:[%s176 + $0x88] sm:$0xff]
        %v351 = vld [vmem:[%s176 + $0x90] sm:$0xff]
        %v352 = vld [vmem:[%s176 + $0x98] sm:$0xff]
        %v353 = vld [vmem:[%s176 + $0xa0] sm:$0xff]
        %v354 = vld [vmem:[%s176 + $0xa8] sm:$0xff]
        %v355 = vld [vmem:[%s176 + $0xb0] sm:$0xff]
        %v356 = vld [vmem:[%s176 + $0xb8] sm:$0xff]
        %v357 = vld [vmem:[%s176 + $0xc0] sm:$0xff]
        %v358 = vld [vmem:[%s176 + $0xc8] sm:$0xff]
        %v359 = vld [vmem:[%s176 + $0xd0] sm:$0xff]
        %v360 = vld [vmem:[%s176 + $0xd8] sm:$0xff]
        %v361 = vld [vmem:[%s176 + $0xe0] sm:$0xff]
        %v362 = vld [vmem:[%s176 + $0xe8] sm:$0xff]
        %v363 = vld [vmem:[%s176 + $0xf0] sm:$0xff]
        %v364 = vld [vmem:[%s176 + $0xf8] sm:$0xff]
        %v365 = vld [vmem:[%s176 + $0x100] sm:$0xff]
        %v366 = vld [vmem:[%s176 + $0x108] sm:$0xff]
        %v367 = vld [vmem:[%s176 + $0x110] sm:$0xff]
        %v368 = vld [vmem:[%s176 + $0x118] sm:$0xff]
        %v369 = vld [vmem:[%s176 + $0x120] sm:$0xff]
        %v370 = vld [vmem:[%s176 + $0x128] sm:$0xff]
        %v371 = vld [vmem:[%s176 + $0x130] sm:$0xff]
        %v372 = vld [vmem:[%s176 + $0x138] sm:$0xff]
        %v373 = vld [vmem:[%s176 + $0x140] sm:$0xff]
        %v374 = vld [vmem:[%s176 + $0x148] sm:$0xff]
        %v375 = vld [vmem:[%s176 + $0x150] sm:$0xff]
        %v376 = vld [vmem:[%s176 + $0x158] sm:$0xff]
        %v377 = vld [vmem:[%s176 + $0x160] sm:$0xff]
        %v378 = vld [vmem:[%s176 + $0x168] sm:$0xff]
        %v379 = vld [vmem:[%s176 + $0x170] sm:$0xff]
        %v380 = vld [vmem:[%s176 + $0x178] sm:$0xff]
        %v381 = vld [vmem:[%s176 + $0x180] sm:$0xff]
        %v382 = vld [vmem:[%s176 + $0x188] sm:$0xff]
        %v383 = vld [vmem:[%s176 + $0x190] sm:$0xff]
        %v384 = vld [vmem:[%s176 + $0x198] sm:$0xff]
        %v385 = vld [vmem:[%s176 + $0x1a0] sm:$0xff]
        %v386 = vld [vmem:[%s176 + $0x1a8] sm:$0xff]
        %v387 = vld [vmem:[%s176 + $0x1b0] sm:$0xff]
        %v388 = vld [vmem:[%s176 + $0x1b8] sm:$0xff]
        %v389 = vld [vmem:[%s176 + $0x1c0] sm:$0xff]
        %v390 = vld [vmem:[%s176 + $0x1c8] sm:$0xff]
        %v391 = vld [vmem:[%s176 + $0x1d0] sm:$0xff]
        %v392 = vld [vmem:[%s176 + $0x1d8] sm:$0xff]
        %v393 = vld [vmem:[%s176 + $0x1e0] sm:$0xff]
        %v394 = vld [vmem:[%s176 + $0x1e8] sm:$0xff]
        %v395 = vld [vmem:[%s176 + $0x1f0] sm:$0xff]
        %v396 = vld [vmem:[%s176 + $0x1f8] sm:$0xff]
        %v397 = vld [vmem:[%s176 + $0x200] sm:$0xff]
        %v398 = vld [vmem:[%s176 + $0x208] sm:$0xff]
        %v399 = vld [vmem:[%s176 + $0x210] sm:$0xff]
        %v400 = vld [vmem:[%s176 + $0x218] sm:$0xff]
        %v401 = vld [vmem:[%s176 + $0x220] sm:$0xff]
        %v402 = vld [vmem:[%s176 + $0x228] sm:$0xff]
        %v403 = vld [vmem:[%s176 + $0x230] sm:$0xff]
        %v404 = vld [vmem:[%s176 + $0x238] sm:$0xff]
        %v405 = vld [vmem:[%s176 + $0x240] sm:$0xff]
        %v406 = vld [vmem:[%s176 + $0x248] sm:$0xff]
        %v407 = vld [vmem:[%s176 + $0x250] sm:$0xff]
        %v408 = vld [vmem:[%s176 + $0x258] sm:$0xff]
        %v409 = vld [vmem:[%s176 + $0x260] sm:$0xff]
        %v410 = vld [vmem:[%s176 + $0x268] sm:$0xff]
        %v411 = vld [vmem:[%s176 + $0x270] sm:$0xff]
        %v412 = vld [vmem:[%s176 + $0x278] sm:$0xff]
        %v413 = vld [vmem:[%s176 + $0x280] sm:$0xff]
        %v414 = vld [vmem:[%s176 + $0x288] sm:$0xff]
        %v415 = vld [vmem:[%s176 + $0x290] sm:$0xff]
        %v416 = vld [vmem:[%s176 + $0x298] sm:$0xff]
        %v417 = vld [vmem:[%s176 + $0x2a0] sm:$0xff]
        %v418 = vld [vmem:[%s176 + $0x2a8] sm:$0xff]
        %v419 = vld [vmem:[%s176 + $0x2b0] sm:$0xff]
        %v420 = vld [vmem:[%s176 + $0x2b8] sm:$0xff]
        %v421 = vld [vmem:[%s176 + $0x2c0] sm:$0xff]
        %v422 = vld [vmem:[%s176 + $0x2c8] sm:$0xff]
        %v423 = vld [vmem:[%s176 + $0x2d0] sm:$0xff]
        %v424 = vld [vmem:[%s176 + $0x2d8] sm:$0xff]
        %v425 = vld [vmem:[%s176 + $0x2e0] sm:$0xff]
        %v426 = vld [vmem:[%s176 + $0x2e8] sm:$0xff]
        %v427 = vld [vmem:[%s176 + $0x2f0] sm:$0xff]
        %v428 = vld [vmem:[%s176 + $0x2f8] sm:$0xff]
        %v429 = vld [vmem:[%s176 + $0x300] sm:$0xff]
        %v430 = vld [vmem:[%s176 + $0x308] sm:$0xff]
        %v431 = vld [vmem:[%s176 + $0x310] sm:$0xff]
        %v432 = vld [vmem:[%s176 + $0x318] sm:$0xff]
        %v433 = vld [vmem:[%s176 + $0x320] sm:$0xff]
        %v434 = vld [vmem:[%s176 + $0x328] sm:$0xff]
        %v435 = vld [vmem:[%s176 + $0x330] sm:$0xff]
        %v436 = vld [vmem:[%s176 + $0x338] sm:$0xff]
        %v437 = vld [vmem:[%s176 + $0x340] sm:$0xff]
        %v438 = vld [vmem:[%s176 + $0x348] sm:$0xff]
        %v439 = vld [vmem:[%s176 + $0x350] sm:$0xff]
        %v440 = vld [vmem:[%s176 + $0x358] sm:$0xff]
        %v441 = vld [vmem:[%s176 + $0x360] sm:$0xff]
        %v442 = vld [vmem:[%s176 + $0x368] sm:$0xff]
        %v443 = vld [vmem:[%s176 + $0x370] sm:$0xff]
        %v444 = vld [vmem:[%s176 + $0x378] sm:$0xff]
        %v445 = vld [vmem:[%s176 + $0x380] sm:$0xff]
        %v446 = vld [vmem:[%s176 + $0x388] sm:$0xff]
        %v447 = vld [vmem:[%s176 + $0x390] sm:$0xff]
        %v448 = vld [vmem:[%s176 + $0x398] sm:$0xff]
        %v449 = vld [vmem:[%s176 + $0x3a0] sm:$0xff]
        %v450 = vld [vmem:[%s176 + $0x3a8] sm:$0xff]
        %v451 = vld [vmem:[%s176 + $0x3b0] sm:$0xff]
        %v452 = vld [vmem:[%s176 + $0x3b8] sm:$0xff]
        %v453 = vld [vmem:[%s176 + $0x3c0] sm:$0xff]
        %v454 = vld [vmem:[%s176 + $0x3c8] sm:$0xff]
        %v455 = vld [vmem:[%s176 + $0x3d0] sm:$0xff]
        %v456 = vld [vmem:[%s176 + $0x3d8] sm:$0xff]
        %v457 = vld [vmem:[%s176 + $0x3e0] sm:$0xff]
        %v458 = vld [vmem:[%s176 + $0x3e8] sm:$0xff]
        %v459 = vld [vmem:[%s176 + $0x3f0] sm:$0xff]
        %v460 = vld [vmem:[%s176 + $0x3f8] sm:$0xff]
        %v461 = vadd.f32 %v205, %v333
        %v462 = vadd.f32 %v206, %v334
        %v463 = vadd.f32 %v207, %v335
        %v464 = vadd.f32 %v208, %v336
        %v465 = vadd.f32 %v209, %v337
        %v466 = vadd.f32 %v210, %v338
        %v467 = vadd.f32 %v211, %v339
        %v468 = vadd.f32 %v212, %v340
        %v469 = vadd.f32 %v213, %v341
        %v470 = vadd.f32 %v214, %v342
        %v471 = vadd.f32 %v215, %v343
        %v472 = vadd.f32 %v216, %v344
        %v473 = vadd.f32 %v217, %v345
        %v474 = vadd.f32 %v218, %v346
        %v475 = vadd.f32 %v219, %v347
        %v476 = vadd.f32 %v220, %v348
        %v477 = vadd.f32 %v221, %v349
        %v478 = vadd.f32 %v222, %v350
        %v479 = vadd.f32 %v223, %v351
        %v480 = vadd.f32 %v224, %v352
        %v481 = vadd.f32 %v225, %v353
        %v482 = vadd.f32 %v226, %v354
        %v483 = vadd.f32 %v227, %v355
        %v484 = vadd.f32 %v228, %v356
        %v485 = vadd.f32 %v229, %v357
        %v486 = vadd.f32 %v230, %v358
        %v487 = vadd.f32 %v231, %v359
        %v488 = vadd.f32 %v232, %v360
        %v489 = vadd.f32 %v233, %v361
        %v490 = vadd.f32 %v234, %v362
        %v491 = vadd.f32 %v235, %v363
        %v492 = vadd.f32 %v236, %v364
        %v493 = vadd.f32 %v237, %v365
        %v494 = vadd.f32 %v238, %v366
        %v495 = vadd.f32 %v239, %v367
        %v496 = vadd.f32 %v240, %v368
        %v497 = vadd.f32 %v241, %v369
        %v498 = vadd.f32 %v242, %v370
        %v499 = vadd.f32 %v243, %v371
        %v500 = vadd.f32 %v244, %v372
        %v501 = vadd.f32 %v245, %v373
        %v502 = vadd.f32 %v246, %v374
        %v503 = vadd.f32 %v247, %v375
        %v504 = vadd.f32 %v248, %v376
        %v505 = vadd.f32 %v249, %v377
        %v506 = vadd.f32 %v250, %v378
        %v507 = vadd.f32 %v251, %v379
        %v508 = vadd.f32 %v252, %v380
        %v509 = vadd.f32 %v253, %v381
        %v510 = vadd.f32 %v254, %v382
        %v511 = vadd.f32 %v255, %v383
        %v512 = vadd.f32 %v256, %v384
        %v513 = vadd.f32 %v257, %v385
        %v514 = vadd.f32 %v258, %v386
        %v515 = vadd.f32 %v259, %v387
        %v516 = vadd.f32 %v260, %v388
        %v517 = vadd.f32 %v261, %v389
        %v518 = vadd.f32 %v262, %v390
        %v519 = vadd.f32 %v263, %v391
        %v520 = vadd.f32 %v264, %v392
        %v521 = vadd.f32 %v265, %v393
        %v522 = vadd.f32 %v266, %v394
        %v523 = vadd.f32 %v267, %v395
        %v524 = vadd.f32 %v268, %v396
        %v525 = vadd.f32 %v269, %v397
        %v526 = vadd.f32 %v270, %v398
        %v527 = vadd.f32 %v271, %v399
        %v528 = vadd.f32 %v272, %v400
        %v529 = vadd.f32 %v273, %v401
        %v530 = vadd.f32 %v274, %v402
        %v531 = vadd.f32 %v275, %v403
        %v532 = vadd.f32 %v276, %v404
        %v533 = vadd.f32 %v277, %v405
        %v534 = vadd.f32 %v278, %v406
        %v535 = vadd.f32 %v279, %v407
        %v536 = vadd.f32 %v280, %v408
        %v537 = vadd.f32 %v281, %v409
        %v538 = vadd.f32 %v282, %v410
        %v539 = vadd.f32 %v283, %v411
        %v540 = vadd.f32 %v284, %v412
        %v541 = vadd.f32 %v285, %v413
        %v542 = vadd.f32 %v286, %v414
        %v543 = vadd.f32 %v287, %v415
        %v544 = vadd.f32 %v288, %v416
        %v545 = vadd.f32 %v289, %v417
        %v546 = vadd.f32 %v290, %v418
        %v547 = vadd.f32 %v291, %v419
        %v548 = vadd.f32 %v292, %v420
        %v549 = vadd.f32 %v293, %v421
        %v550 = vadd.f32 %v294, %v422
        %v551 = vadd.f32 %v295, %v423
        %v552 = vadd.f32 %v296, %v424
        %v553 = vadd.f32 %v297, %v425
        %v554 = vadd.f32 %v298, %v426
        %v555 = vadd.f32 %v299, %v427
        %v556 = vadd.f32 %v300, %v428
        %v557 = vadd.f32 %v301, %v429
        %v558 = vadd.f32 %v302, %v430
        %v559 = vadd.f32 %v303, %v431
        %v560 = vadd.f32 %v304, %v432
        %v561 = vadd.f32 %v305, %v433
        %v562 = vadd.f32 %v306, %v434
        %v563 = vadd.f32 %v307, %v435
        %v564 = vadd.f32 %v308, %v436
        %v565 = vadd.f32 %v309, %v437
        %v566 = vadd.f32 %v310, %v438
        %v567 = vadd.f32 %v311, %v439
        %v568 = vadd.f32 %v312, %v440
        %v569 = vadd.f32 %v313, %v441
        %v570 = vadd.f32 %v314, %v442
        %v571 = vadd.f32 %v315, %v443
        %v572 = vadd.f32 %v316, %v444
        %v573 = vadd.f32 %v317, %v445
        %v574 = vadd.f32 %v318, %v446
        %v575 = vadd.f32 %v319, %v447
        %v576 = vadd.f32 %v320, %v448
        %v577 = vadd.f32 %v321, %v449
        %v578 = vadd.f32 %v322, %v450
        %v579 = vadd.f32 %v323, %v451
        %v580 = vadd.f32 %v324, %v452
        %v581 = vadd.f32 %v325, %v453
        %v582 = vadd.f32 %v326, %v454
        %v583 = vadd.f32 %v327, %v455
        %v584 = vadd.f32 %v328, %v456
        %v585 = vadd.f32 %v329, %v457
        %v586 = vadd.f32 %v330, %v458
        %v587 = vadd.f32 %v331, %v459
        %v588 = vadd.f32 %v332, %v460
        %v589 = vmul.f32 %v461, 0.5
        %v590 = vmul.f32 %v462, 0.5
        %v591 = vmul.f32 %v463, 0.5
        %v592 = vmul.f32 %v464, 0.5
        %v593 = vmul.f32 %v465, 0.5
        %v594 = vmul.f32 %v466, 0.5
        %v595 = vmul.f32 %v467, 0.5
        %v596 = vmul.f32 %v468, 0.5
        %v597 = vmul.f32 %v469, 0.5
        %v598 = vmul.f32 %v470, 0.5
        %v599 = vmul.f32 %v471, 0.5
        %v600 = vmul.f32 %v472, 0.5
        %v601 = vmul.f32 %v473, 0.5
        %v602 = vmul.f32 %v474, 0.5
        %v603 = vmul.f32 %v475, 0.5
        %v604 = vmul.f32 %v476, 0.5
        %v605 = vmul.f32 %v477, 0.5
        %v606 = vmul.f32 %v478, 0.5
        %v607 = vmul.f32 %v479, 0.5
        %v608 = vmul.f32 %v480, 0.5
        %v609 = vmul.f32 %v481, 0.5
        %v610 = vmul.f32 %v482, 0.5
        %v611 = vmul.f32 %v483, 0.5
        %v612 = vmul.f32 %v484, 0.5
        %v613 = vmul.f32 %v485, 0.5
        %v614 = vmul.f32 %v486, 0.5
        %v615 = vmul.f32 %v487, 0.5
        %v616 = vmul.f32 %v488, 0.5
        %v617 = vmul.f32 %v489, 0.5
        %v618 = vmul.f32 %v490, 0.5
        %v619 = vmul.f32 %v491, 0.5
        %v620 = vmul.f32 %v492, 0.5
        %v621 = vmul.f32 %v493, 0.5
        %v622 = vmul.f32 %v494, 0.5
        %v623 = vmul.f32 %v495, 0.5
        %v624 = vmul.f32 %v496, 0.5
        %v625 = vmul.f32 %v497, 0.5
        %v626 = vmul.f32 %v498, 0.5
        %v627 = vmul.f32 %v499, 0.5
        %v628 = vmul.f32 %v500, 0.5
        %v629 = vmul.f32 %v501, 0.5
        %v630 = vmul.f32 %v502, 0.5
        %v631 = vmul.f32 %v503, 0.5
        %v632 = vmul.f32 %v504, 0.5
        %v633 = vmul.f32 %v505, 0.5
        %v634 = vmul.f32 %v506, 0.5
        %v635 = vmul.f32 %v507, 0.5
        %v636 = vmul.f32 %v508, 0.5
        %v637 = vmul.f32 %v509, 0.5
        %v638 = vmul.f32 %v510, 0.5
        %v639 = vmul.f32 %v511, 0.5
        %v640 = vmul.f32 %v512, 0.5
        %v641 = vmul.f32 %v513, 0.5
        %v642 = vmul.f32 %v514, 0.5
        %v643 = vmul.f32 %v515, 0.5
        %v644 = vmul.f32 %v516, 0.5
        %v645 = vmul.f32 %v517, 0.5
        %v646 = vmul.f32 %v518, 0.5
        %v647 = vmul.f32 %v519, 0.5
        %v648 = vmul.f32 %v520, 0.5
        %v649 = vmul.f32 %v521, 0.5
        %v650 = vmul.f32 %v522, 0.5
        %v651 = vmul.f32 %v523, 0.5
        %v652 = vmul.f32 %v524, 0.5
        %v653 = vmul.f32 %v525, 0.5
        %v654 = vmul.f32 %v526, 0.5
        %v655 = vmul.f32 %v527, 0.5
        %v656 = vmul.f32 %v528, 0.5
        %v657 = vmul.f32 %v529, 0.5
        %v658 = vmul.f32 %v530, 0.5
        %v659 = vmul.f32 %v531, 0.5
        %v660 = vmul.f32 %v532, 0.5
        %v661 = vmul.f32 %v533, 0.5
        %v662 = vmul.f32 %v534, 0.5
        %v663 = vmul.f32 %v535, 0.5
        %v664 = vmul.f32 %v536, 0.5
        %v665 = vmul.f32 %v537, 0.5
        %v666 = vmul.f32 %v538, 0.5
        %v667 = vmul.f32 %v539, 0.5
        %v668 = vmul.f32 %v540, 0.5
        %v669 = vmul.f32 %v541, 0.5
        %v670 = vmul.f32 %v542, 0.5
        %v671 = vmul.f32 %v543, 0.5
        %v672 = vmul.f32 %v544, 0.5
        %v673 = vmul.f32 %v545, 0.5
        %v674 = vmul.f32 %v546, 0.5
        %v675 = vmul.f32 %v547, 0.5
        %v676 = vmul.f32 %v548, 0.5
        %v677 = vmul.f32 %v549, 0.5
        %v678 = vmul.f32 %v550, 0.5
        %v679 = vmul.f32 %v551, 0.5
        %v680 = vmul.f32 %v552, 0.5
        %v681 = vmul.f32 %v553, 0.5
        %v682 = vmul.f32 %v554, 0.5
        %v683 = vmul.f32 %v555, 0.5
        %v684 = vmul.f32 %v556, 0.5
        %v685 = vmul.f32 %v557, 0.5
        %v686 = vmul.f32 %v558, 0.5
        %v687 = vmul.f32 %v559, 0.5
        %v688 = vmul.f32 %v560, 0.5
        %v689 = vmul.f32 %v561, 0.5
        %v690 = vmul.f32 %v562, 0.5
        %v691 = vmul.f32 %v563, 0.5
        %v692 = vmul.f32 %v564, 0.5
        %v693 = vmul.f32 %v565, 0.5
        %v694 = vmul.f32 %v566, 0.5
        %v695 = vmul.f32 %v567, 0.5
        %v696 = vmul.f32 %v568, 0.5
        %v697 = vmul.f32 %v569, 0.5
        %v698 = vmul.f32 %v570, 0.5
        %v699 = vmul.f32 %v571, 0.5
        %v700 = vmul.f32 %v572, 0.5
        %v701 = vmul.f32 %v573, 0.5
        %v702 = vmul.f32 %v574, 0.5
        %v703 = vmul.f32 %v575, 0.5
        %v704 = vmul.f32 %v576, 0.5
        %v705 = vmul.f32 %v577, 0.5
        %v706 = vmul.f32 %v578, 0.5
        %v707 = vmul.f32 %v579, 0.5
        %v708 = vmul.f32 %v580, 0.5
        %v709 = vmul.f32 %v581, 0.5
        %v710 = vmul.f32 %v582, 0.5
        %v711 = vmul.f32 %v583, 0.5
        %v712 = vmul.f32 %v584, 0.5
        %v713 = vmul.f32 %v585, 0.5
        %v714 = vmul.f32 %v586, 0.5
        %v715 = vmul.f32 %v587, 0.5
        %v716 = vmul.f32 %v588, 0.5
        %717 = vst [vmem:[%s201] sm:$0xff] %v589
        %718 = vst [vmem:[%s201 + $0x8] sm:$0xff] %v590
        %719 = vst [vmem:[%s201 + $0x10] sm:$0xff] %v591
        %720 = vst [vmem:[%s201 + $0x18] sm:$0xff] %v592
        %721 = vst [vmem:[%s201 + $0x20] sm:$0xff] %v593
        %722 = vst [vmem:[%s201 + $0x28] sm:$0xff] %v594
        %723 = vst [vmem:[%s201 + $0x30] sm:$0xff] %v595
        %724 = vst [vmem:[%s201 + $0x38] sm:$0xff] %v596
        %725 = vst [vmem:[%s201 + $0x40] sm:$0xff] %v597
        %726 = vst [vmem:[%s201 + $0x48] sm:$0xff] %v598
        %727 = vst [vmem:[%s201 + $0x50] sm:$0xff] %v599
        %728 = vst [vmem:[%s201 + $0x58] sm:$0xff] %v600
        %729 = vst [vmem:[%s201 + $0x60] sm:$0xff] %v601
        %730 = vst [vmem:[%s201 + $0x68] sm:$0xff] %v602
        %731 = vst [vmem:[%s201 + $0x70] sm:$0xff] %v603
        %732 = vst [vmem:[%s201 + $0x78] sm:$0xff] %v604
        %733 = vst [vmem:[%s201 + $0x80] sm:$0xff] %v605
        %734 = vst [vmem:[%s201 + $0x88] sm:$0xff] %v606
        %735 = vst [vmem:[%s201 + $0x90] sm:$0xff] %v607
        %736 = vst [vmem:[%s201 + $0x98] sm:$0xff] %v608
        %737 = vst [vmem:[%s201 + $0xa0] sm:$0xff] %v609
        %738 = vst [vmem:[%s201 + $0xa8] sm:$0xff] %v610
        %739 = vst [vmem:[%s201 + $0xb0] sm:$0xff] %v611
        %740 = vst [vmem:[%s201 + $0xb8] sm:$0xff] %v612
        %741 = vst [vmem:[%s201 + $0xc0] sm:$0xff] %v613
        %742 = vst [vmem:[%s201 + $0xc8] sm:$0xff] %v614
        %743 = vst [vmem:[%s201 + $0xd0] sm:$0xff] %v615
        %744 = vst [vmem:[%s201 + $0xd8] sm:$0xff] %v616
        %745 = vst [vmem:[%s201 + $0xe0] sm:$0xff] %v617
        %746 = vst [vmem:[%s201 + $0xe8] sm:$0xff] %v618
        %747 = vst [vmem:[%s201 + $0xf0] sm:$0xff] %v619
        %748 = vst [vmem:[%s201 + $0xf8] sm:$0xff] %v620
        %749 = vst [vmem:[%s201 + $0x100] sm:$0xff] %v621
        %750 = vst [vmem:[%s201 + $0x108] sm:$0xff] %v622
        %751 = vst [vmem:[%s201 + $0x110] sm:$0xff] %v623
        %752 = vst [vmem:[%s201 + $0x118] sm:$0xff] %v624
        %753 = vst [vmem:[%s201 + $0x120] sm:$0xff] %v625
        %754 = vst [vmem:[%s201 + $0x128] sm:$0xff] %v626
        %755 = vst [vmem:[%s201 + $0x130] sm:$0xff] %v627
        %756 = vst [vmem:[%s201 + $0x138] sm:$0xff] %v628
        %757 = vst [vmem:[%s201 + $0x140] sm:$0xff] %v629
        %758 = vst [vmem:[%s201 + $0x148] sm:$0xff] %v630
        %759 = vst [vmem:[%s201 + $0x150] sm:$0xff] %v631
        %760 = vst [vmem:[%s201 + $0x158] sm:$0xff] %v632
        %761 = vst [vmem:[%s201 + $0x160] sm:$0xff] %v633
        %762 = vst [vmem:[%s201 + $0x168] sm:$0xff] %v634
        %763 = vst [vmem:[%s201 + $0x170] sm:$0xff] %v635
        %764 = vst [vmem:[%s201 + $0x178] sm:$0xff] %v636
        %765 = vst [vmem:[%s201 + $0x180] sm:$0xff] %v637
        %766 = vst [vmem:[%s201 + $0x188] sm:$0xff] %v638
        %767 = vst [vmem:[%s201 + $0x190] sm:$0xff] %v639
        %768 = vst [vmem:[%s201 + $0x198] sm:$0xff] %v640
        %769 = vst [vmem:[%s201 + $0x1a0] sm:$0xff] %v641
        %770 = vst [vmem:[%s201 + $0x1a8] sm:$0xff] %v642
        %771 = vst [vmem:[%s201 + $0x1b0] sm:$0xff] %v643
        %772 = vst [vmem:[%s201 + $0x1b8] sm:$0xff] %v644
        %773 = vst [vmem:[%s201 + $0x1c0] sm:$0xff] %v645
        %774 = vst [vmem:[%s201 + $0x1c8] sm:$0xff] %v646
        %775 = vst [vmem:[%s201 + $0x1d0] sm:$0xff] %v647
        %776 = vst [vmem:[%s201 + $0x1d8] sm:$0xff] %v648
        %777 = vst [vmem:[%s201 + $0x1e0] sm:$0xff] %v649
        %778 = vst [vmem:[%s201 + $0x1e8] sm:$0xff] %v650
        %779 = vst [vmem:[%s201 + $0x1f0] sm:$0xff] %v651
        %780 = vst [vmem:[%s201 + $0x1f8] sm:$0xff] %v652
        %781 = vst [vmem:[%s201 + $0x200] sm:$0xff] %v653
        %782 = vst [vmem:[%s201 + $0x208] sm:$0xff] %v654
        %783 = vst [vmem:[%s201 + $0x210] sm:$0xff] %v655
        %784 = vst [vmem:[%s201 + $0x218] sm:$0xff] %v656
        %785 = vst [vmem:[%s201 + $0x220] sm:$0xff] %v657
        %786 = vst [vmem:[%s201 + $0x228] sm:$0xff] %v658
        %787 = vst [vmem:[%s201 + $0x230] sm:$0xff] %v659
        %788 = vst [vmem:[%s201 + $0x238] sm:$0xff] %v660
        %789 = vst [vmem:[%s201 + $0x240] sm:$0xff] %v661
        %790 = vst [vmem:[%s201 + $0x248] sm:$0xff] %v662
        %791 = vst [vmem:[%s201 + $0x250] sm:$0xff] %v663
        %792 = vst [vmem:[%s201 + $0x258] sm:$0xff] %v664
        %793 = vst [vmem:[%s201 + $0x260] sm:$0xff] %v665
        %794 = vst [vmem:[%s201 + $0x268] sm:$0xff] %v666
        %795 = vst [vmem:[%s201 + $0x270] sm:$0xff] %v667
        %796 = vst [vmem:[%s201 + $0x278] sm:$0xff] %v668
        %797 = vst [vmem:[%s201 + $0x280] sm:$0xff] %v669
        %798 = vst [vmem:[%s201 + $0x288] sm:$0xff] %v670
        %799 = vst [vmem:[%s201 + $0x290] sm:$0xff] %v671
        %800 = vst [vmem:[%s201 + $0x298] sm:$0xff] %v672
        %801 = vst [vmem:[%s201 + $0x2a0] sm:$0xff] %v673
        %802 = vst [vmem:[%s201 + $0x2a8] sm:$0xff] %v674
        %803 = vst [vmem:[%s201 + $0x2b0] sm:$0xff] %v675
        %804 = vst [vmem:[%s201 + $0x2b8] sm:$0xff] %v676
        %805 = vst [vmem:[%s201 + $0x2c0] sm:$0xff] %v677
        %806 = vst [vmem:[%s201 + $0x2c8] sm:$0xff] %v678
        %807 = vst [vmem:[%s201 + $0x2d0] sm:$0xff] %v679
        %808 = vst [vmem:[%s201 + $0x2d8] sm:$0xff] %v680
        %809 = vst [vmem:[%s201 + $0x2e0] sm:$0xff] %v681
        %810 = vst [vmem:[%s201 + $0x2e8] sm:$0xff] %v682
        %811 = vst [vmem:[%s201 + $0x2f0] sm:$0xff] %v683
        %812 = vst [vmem:[%s201 + $0x2f8] sm:$0xff] %v684
        %813 = vst [vmem:[%s201 + $0x300] sm:$0xff] %v685
        %814 = vst [vmem:[%s201 + $0x308] sm:$0xff] %v686
        %815 = vst [vmem:[%s201 + $0x310] sm:$0xff] %v687
        %816 = vst [vmem:[%s201 + $0x318] sm:$0xff] %v688
        %817 = vst [vmem:[%s201 + $0x320] sm:$0xff] %v689
        %818 = vst [vmem:[%s201 + $0x328] sm:$0xff] %v690
        %819 = vst [vmem:[%s201 + $0x330] sm:$0xff] %v691
        %820 = vst [vmem:[%s201 + $0x338] sm:$0xff] %v692
        %821 = vst [vmem:[%s201 + $0x340] sm:$0xff] %v693
        %822 = vst [vmem:[%s201 + $0x348] sm:$0xff] %v694
        %823 = vst [vmem:[%s201 + $0x350] sm:$0xff] %v695
        %824 = vst [vmem:[%s201 + $0x358] sm:$0xff] %v696
        %825 = vst [vmem:[%s201 + $0x360] sm:$0xff] %v697
        %826 = vst [vmem:[%s201 + $0x368] sm:$0xff] %v698
        %827 = vst [vmem:[%s201 + $0x370] sm:$0xff] %v699
        %828 = vst [vmem:[%s201 + $0x378] sm:$0xff] %v700
        %829 = vst [vmem:[%s201 + $0x380] sm:$0xff] %v701
        %830 = vst [vmem:[%s201 + $0x388] sm:$0xff] %v702
        %831 = vst [vmem:[%s201 + $0x390] sm:$0xff] %v703
        %832 = vst [vmem:[%s201 + $0x398] sm:$0xff] %v704
        %833 = vst [vmem:[%s201 + $0x3a0] sm:$0xff] %v705
        %834 = vst [vmem:[%s201 + $0x3a8] sm:$0xff] %v706
        %835 = vst [vmem:[%s201 + $0x3b0] sm:$0xff] %v707
        %836 = vst [vmem:[%s201 + $0x3b8] sm:$0xff] %v708
        %837 = vst [vmem:[%s201 + $0x3c0] sm:$0xff] %v709
        %838 = vst [vmem:[%s201 + $0x3c8] sm:$0xff] %v710
        %839 = vst [vmem:[%s201 + $0x3d0] sm:$0xff] %v711
        %840 = vst [vmem:[%s201 + $0x3d8] sm:$0xff] %v712
        %841 = vst [vmem:[%s201 + $0x3e0] sm:$0xff] %v713
        %842 = vst [vmem:[%s201 + $0x3e8] sm:$0xff] %v714
        %843 = vst [vmem:[%s201 + $0x3f0] sm:$0xff] %v715
        %844 = vst [vmem:[%s201 + $0x3f8] sm:$0xff] %v716
        %s845 = sand.u32 %s82, 1
        %s846 = scalar_lea.sflag [#allocation4], %s845
        %s847 = sand.u32 %s82, 1
        %s848 = smul.addr %s847, 1024
        %s849 = scalar_lea.vmem [#allocation7], %s848
        // Predicated region
        $region37: #{tpu_custom_call.1} parent=27 // pred_check
          %p850 = pneg %p92
        $region38: #{tpu_custom_call.1} parent=27 // pred_check_branch
          %852 = sbr.rel (%p850) target = $region40
        $region39: #{tpu_custom_call.1} parent=27 // pred_region
          %s853 = smul.u32 128, %s22
          %s855 = ssub.s32 16384, 16384
          %856 = vsyncadd %s846, %s855
          %s857 = smul.addr %s853, 128
          %s858 = scalar_lea.hbm %s2, %s857
          %s859 = sshll.u32 %s849, 4
          %s860 = int_to_ptr.vmem [resolvable:$true] %s859
          %865 = dma.vmem_to_hbm [thread:$0]  %s860, 16384, %s858, %s846, 128, 128, 8
        $region40: #{tpu_custom_call.1} parent=27 // pred_fallthru
          _
      $region28: #{tpu_custom_call.1} parent=5 // pred_fallthru
        _
      %p866 = scmp.le.s32.totalorder 2, %s17
      // Predicated region
      $region41: #{tpu_custom_call.1} parent=5 // pred_check
        %p867 = pneg %p866
      $region42: #{tpu_custom_call.1} parent=5 // pred_check_branch
        %869 = sbr.rel (%p867) target = $region44
      $region43: #{tpu_custom_call.1} parent=5 // pred_region
        %s870 = ssub.s32 %s17, 2
        // Predicated region
        $region45: #{tpu_custom_call.1} parent=43 // pred_check
          %p871 = pneg %p98
        $region46: #{tpu_custom_call.1} parent=43 // pred_check_branch
          %873 = sbr.rel (%p871) target = $region48
        $region47: #{tpu_custom_call.1} parent=43 // pred_region
          %s874 = sand.u32 %s83, 1
          %s875 = scalar_lea.sflag [#allocation4], %s874
          %s876 = sand.u32 %s83, 1
          %s877 = smul.addr %s876, 1024
          %s878 = scalar_lea.vmem [#allocation7], %s877
          %879 = dma.done %s875, 16384
        $region48: #{tpu_custom_call.1} parent=43 // pred_fallthru
          _
      $region44: #{tpu_custom_call.1} parent=5 // pred_fallthru
        _
    $region6: #{tpu_custom_call.1} parent=1 // loop_footer
      %s21 = sadd.s32 1, %s17
    $region7: #{tpu_custom_call.1} parent=1 // loop_footer_branch
      %16 = sbr.rel target = $region3
    $region8: #{tpu_custom_call.1} parent=1 // loop_exit
      _
    %880 = vsyncpa [#allocation3], 1
    %s881 = scalar_lea.sflag [#allocation3], 1
    %882 = vsyncpa %s881, 1
    %883 = vsyncpa [#allocation6], 1
    %s884 = scalar_lea.sflag [#allocation6], 1
    %885 = vsyncpa %s884, 1
    %886 = vsyncpa [#allocation4], 1
    %s887 = scalar_lea.sflag [#allocation4], 1
    %888 = vsyncpa %s887, 1

</llo_original>
